<compile_context>
chip_gen: v5e
topology: v5e:2x2
jax: 0.10.0
libtpu: 0.0.40
codegen_flags: <defaults>
</compile_context>

<pallas_src>
import numpy as np
import jax
import jax.numpy as jnp
from jax.experimental import pallas as pl
from jax.experimental.pallas import tpu as pltpu

STATE_SPACE = 11    # Hopper-v2 observation dim
ACTION_SPACE = 3    # Hopper-v2 action dim
H1, H2 = 400, 300
DIS = 0.003

# Lane/MXU-aligned padded feature dims (multiples of 128).
H1_PAD = 512
H2_PAD = 384
A_PAD = 128


def actor_kernel(x_ref, w1_ref, b1_ref, w2_ref, b2_ref, w3_ref, b3_ref, out_ref):
    """3-layer MLP for one (TB, STATE_SPACE) activation tile; weights are VMEM-resident."""
    # fc1 + ReLU.  K = 11 (unpadded); f32 operands keep lowering simple and the
    # cost is negligible at this K.
    h = jnp.dot(x_ref[...], w1_ref[...], preferred_element_type=jnp.float32) + b1_ref[...]
    h = jnp.maximum(h, 0.0)

    # fc2 + ReLU  (bf16 MXU operands, f32 accumulation; elementwise stays f32).
    h = jnp.dot(h.astype(jnp.bfloat16), w2_ref[...],
                preferred_element_type=jnp.float32) + b2_ref[...]
    h = jnp.maximum(h, 0.0)

    # fc3 + tanh
    h = jnp.dot(h.astype(jnp.bfloat16), w3_ref[...],
                preferred_element_type=jnp.float32) + b3_ref[...]
    out_ref[...] = jnp.tanh(h).astype(out_ref.dtype)


def _pad2(a, rows, cols, dtype):
    out = jnp.zeros((rows, cols), dtype)
    return out.at[: a.shape[0], : a.shape[1]].set(a.astype(dtype))


def pad_params(params):
    """Zero-pad params to aligned shapes.  Call ONCE per parameter update and
    reuse the result across forward calls (RL rollout) — not per forward."""
    w1, b1, w2, b2, w3, b3 = params
    return (
        _pad2(w1, STATE_SPACE, H1_PAD, jnp.float32),   # fc1 stays f32 (tiny K)
        _pad2(b1, 1, H1_PAD, jnp.float32),
        _pad2(w2, H1_PAD, H2_PAD, jnp.bfloat16),
        _pad2(b2, 1, H2_PAD, jnp.float32),
        _pad2(w3, H2_PAD, A_PAD, jnp.bfloat16),
        _pad2(b3, 1, A_PAD, jnp.float32),
    )


def _choose_tiling(batch, tb_max):
    """Pick (tb, batch_pad): tiles are multiples of 16 rows (bf16 output tile),
    padding waste is bounded by n*16 rows, and large batches get >= 2 tiles
    (engages both TensorCores on v7x via the parallel grid axis)."""
    b16 = max(16, pl.cdiv(batch, 16) * 16)
    if b16 <= tb_max:
        return b16, b16                       # single tile, minimal padding
    n = pl.cdiv(b16, tb_max)                  # number of grid tiles (>= 2)
    tb = pl.cdiv(b16, n)
    tb = pl.cdiv(tb, 16) * 16
    return tb, n * tb


def actor_forward(x, padded_params, *, tb_max=512):
    """Batch-tiled Pallas forward. `padded_params` comes from pad_params().
    Returns (batch, ACTION_SPACE) f32."""
    w1p, b1p, w2p, b2p, w3p, b3p = padded_params

    batch = x.shape[0]
    tb, batch_pad = _choose_tiling(batch, tb_max)

    if batch_pad != batch:
        x_pad = jnp.zeros((batch_pad, STATE_SPACE), jnp.float32).at[:batch].set(x)
    else:
        x_pad = x.astype(jnp.float32)

    resident = lambda i: (0, 0)  # weights/biases stay VMEM-resident across steps

    out_pad = pl.pallas_call(
        actor_kernel,
        out_shape=jax.ShapeDtypeStruct((batch_pad, A_PAD), jnp.bfloat16),
        grid_spec=pltpu.PrefetchScalarGridSpec(
            num_scalar_prefetch=0,
            grid=(batch_pad // tb,),
            in_specs=[
                pl.BlockSpec((tb, STATE_SPACE), lambda i: (i, 0)),
                pl.BlockSpec((STATE_SPACE, H1_PAD), resident),
                pl.BlockSpec((1, H1_PAD), resident),
                pl.BlockSpec((H1_PAD, H2_PAD), resident),
                pl.BlockSpec((1, H2_PAD), resident),
                pl.BlockSpec((H2_PAD, A_PAD), resident),
                pl.BlockSpec((1, A_PAD), resident),
            ],
            out_specs=pl.BlockSpec((tb, A_PAD), lambda i: (i, 0)),
        ),
        compiler_params=pltpu.CompilerParams(
            # Batch tiles are independent -> shard across TensorCores on v7x.
            dimension_semantics=("parallel",),
        ),
    )(x_pad, w1p, b1p, w2p, b2p, w3p, b3p)

    return out_pad[:batch, :ACTION_SPACE].astype(jnp.float32)


def fanin_init(key, size, fanin=None):
    """Mirror of the PyTorch fanin_init: uniform(-1/sqrt(fanin), 1/sqrt(fanin)).

    `size` follows the PyTorch nn.Linear weight convention (out_features, in_features),
    and like the original code fanin defaults to size[0]."""
    fanin = fanin or size[0]
    v = 1.0 / np.sqrt(fanin)
    return jax.random.uniform(key, size, jnp.float32, minval=-v, maxval=v)


def init_params(key):
    """Deterministic synthetic parameters matching ActorNet.__init__ / init_weight shapes."""
    ks = jax.random.split(key, 6)

    # Weights created in PyTorch (out, in) convention, then transposed to (in, out)
    # for the kernel's x @ W layout.
    w1_pt = fanin_init(ks[0], (H1, STATE_SPACE))              # fc1.weight
    w2_pt = fanin_init(ks[1], (H2, H1))                       # fc2.weight
    w3_pt = jax.random.uniform(ks[2], (ACTION_SPACE, H2),
                               jnp.float32, minval=-DIS, maxval=DIS)  # fc3.weight

    # Biases: PyTorch default Linear bias init U(-1/sqrt(fan_in), 1/sqrt(fan_in))
    def bias(k, out_dim, fan_in):
        b = 1.0 / np.sqrt(fan_in)
        return jax.random.uniform(k, (1, out_dim), jnp.float32, minval=-b, maxval=b)

    b1 = bias(ks[3], H1, STATE_SPACE)
    b2 = bias(ks[4], H2, H1)
    b3 = bias(ks[5], ACTION_SPACE, H2)

    return (w1_pt.T, b1, w2_pt.T, b2, w3_pt.T, b3)


def actor_ref(x, params):
    """Pure-JAX f32 reference for correctness check."""
    w1, b1, w2, b2, w3, b3 = params
    h = jnp.maximum(x @ w1 + b1, 0.0)
    h = jnp.maximum(h @ w2 + b2, 0.0)
    return jnp.tanh(h @ w3 + b3)


if __name__ == "__main__":
    key = jax.random.PRNGKey(0)
    k_params, k_x = jax.random.split(key)

    params = init_params(k_params)
    padded_params = pad_params(params)          # pad once, reuse every call
    padded_params = jax.block_until_ready(padded_params)

    batch = 2
    x = jax.random.normal(k_x, (batch, STATE_SPACE), jnp.float32)

    out = actor_forward(x, padded_params)
    out = jax.block_until_ready(out)

    ref = actor_ref(x, params)
    # Looser tolerance: fc2/fc3 use bf16 operands (f32 accumulation) and the
    # kernel output is stored as bf16.
    np.testing.assert_allclose(np.asarray(out), np.asarray(ref), rtol=1e-2, atol=1e-2)
    assert out.shape == (batch, ACTION_SPACE)
    assert bool(jnp.all(jnp.abs(out) <= 1.0))  # tanh output range

    print("KERNEL_OK")
</pallas_src>

<mosaic_0001>
module attributes {stable_mosaic.version = 11 : i64} {
  func.func @actor_kernel(%arg0: i32, %arg1: memref<16x11xf32, #tpu.memory_space<vmem>>, %arg2: memref<11x512xf32, #tpu.memory_space<vmem>>, %arg3: memref<1x512xf32, #tpu.memory_space<vmem>>, %arg4: memref<512x384xbf16, #tpu.memory_space<vmem>>, %arg5: memref<1x384xf32, #tpu.memory_space<vmem>>, %arg6: memref<384x128xbf16, #tpu.memory_space<vmem>>, %arg7: memref<1x128xf32, #tpu.memory_space<vmem>>, %arg8: memref<16x128xbf16, #tpu.memory_space<vmem>>) attributes {dimension_semantics = [#tpu.dimension_semantics<parallel>], iteration_bounds = array<i64: 1>, scalar_prefetch = 0 : i64, scratch_operands = 0 : i64, tpu.core_type = #tpu.core_type<tc>, window_params = [{transform_indices = @transform_0, window_bounds = array<i64: 16, 11>}, {pipeline_mode = #tpu.pipeline_mode<synchronous>, transform_indices = @transform_1, window_bounds = array<i64: 11, 512>}, {pipeline_mode = #tpu.pipeline_mode<synchronous>, transform_indices = @transform_2, window_bounds = array<i64: 1, 512>}, {pipeline_mode = #tpu.pipeline_mode<synchronous>, transform_indices = @transform_3, window_bounds = array<i64: 512, 384>}, {pipeline_mode = #tpu.pipeline_mode<synchronous>, transform_indices = @transform_4, window_bounds = array<i64: 1, 384>}, {pipeline_mode = #tpu.pipeline_mode<synchronous>, transform_indices = @transform_5, window_bounds = array<i64: 384, 128>}, {pipeline_mode = #tpu.pipeline_mode<synchronous>, transform_indices = @transform_6, window_bounds = array<i64: 1, 128>}, {transform_indices = @transform_7, window_bounds = array<i64: 16, 128>}]} {
    %c0 = arith.constant 0 : index
    %c0_0 = arith.constant 0 : index
    %0 = vector.load %arg1[%c0, %c0_0] : memref<16x11xf32, #tpu.memory_space<vmem>>, vector<16x11xf32>
    %c0_1 = arith.constant 0 : index
    %c0_2 = arith.constant 0 : index
    %1 = vector.load %arg2[%c0_1, %c0_2] : memref<11x512xf32, #tpu.memory_space<vmem>>, vector<11x512xf32>
    %cst = arith.constant dense<0.000000e+00> : vector<16x512xf32>
    %2 = tpu.matmul %0, %1, %cst {dimension_numbers = #tpu.dot_dimension_numbers<[1], [0], [0], [1], [0, 0, 1, 1], [], []>} : vector<16x11xf32>, vector<11x512xf32>, vector<16x512xf32> -> vector<16x512xf32>
    %c0_3 = arith.constant 0 : index
    %c0_4 = arith.constant 0 : index
    %3 = vector.load %arg3[%c0_3, %c0_4] : memref<1x512xf32, #tpu.memory_space<vmem>>, vector<1x512xf32>
    %4 = vector.broadcast %3 : vector<1x512xf32> to vector<16x512xf32>
    %5 = arith.addf %2, %4 : vector<16x512xf32>
    %cst_5 = arith.constant 0.000000e+00 : f32
    %6 = vector.broadcast %cst_5 : f32 to vector<16x512xf32>
    %7 = arith.maximumf %5, %6 : vector<16x512xf32>
    %8 = arith.truncf %7 : vector<16x512xf32> to vector<16x512xbf16>
    %c0_6 = arith.constant 0 : index
    %c0_7 = arith.constant 0 : index
    %9 = vector.load %arg4[%c0_6, %c0_7] : memref<512x384xbf16, #tpu.memory_space<vmem>>, vector<512x384xbf16>
    %cst_8 = arith.constant dense<0.000000e+00> : vector<16x384xf32>
    %10 = tpu.matmul %8, %9, %cst_8 {dimension_numbers = #tpu.dot_dimension_numbers<[1], [0], [0], [1], [0, 0, 1, 1], [], []>} : vector<16x512xbf16>, vector<512x384xbf16>, vector<16x384xf32> -> vector<16x384xf32>
    %c0_9 = arith.constant 0 : index
    %c0_10 = arith.constant 0 : index
    %11 = vector.load %arg5[%c0_9, %c0_10] : memref<1x384xf32, #tpu.memory_space<vmem>>, vector<1x384xf32>
    %12 = vector.broadcast %11 : vector<1x384xf32> to vector<16x384xf32>
    %13 = arith.addf %10, %12 : vector<16x384xf32>
    %cst_11 = arith.constant 0.000000e+00 : f32
    %14 = vector.broadcast %cst_11 : f32 to vector<16x384xf32>
    %15 = arith.maximumf %13, %14 : vector<16x384xf32>
    %16 = arith.truncf %15 : vector<16x384xf32> to vector<16x384xbf16>
    %c0_12 = arith.constant 0 : index
    %c0_13 = arith.constant 0 : index
    %17 = vector.load %arg6[%c0_12, %c0_13] : memref<384x128xbf16, #tpu.memory_space<vmem>>, vector<384x128xbf16>
    %cst_14 = arith.constant dense<0.000000e+00> : vector<16x128xf32>
    %18 = tpu.matmul %16, %17, %cst_14 {dimension_numbers = #tpu.dot_dimension_numbers<[1], [0], [0], [1], [0, 0, 1, 1], [], []>} : vector<16x384xbf16>, vector<384x128xbf16>, vector<16x128xf32> -> vector<16x128xf32>
    %c0_15 = arith.constant 0 : index
    %c0_16 = arith.constant 0 : index
    %19 = vector.load %arg7[%c0_15, %c0_16] : memref<1x128xf32, #tpu.memory_space<vmem>>, vector<1x128xf32>
    %20 = vector.broadcast %19 : vector<1x128xf32> to vector<16x128xf32>
    %21 = arith.addf %18, %20 : vector<16x128xf32>
    %22 = math.tanh %21 : vector<16x128xf32>
    %23 = arith.truncf %22 : vector<16x128xf32> to vector<16x128xbf16>
    %c0_17 = arith.constant 0 : index
    %c0_18 = arith.constant 0 : index
    %24 = vector.load %arg8[%c0_17, %c0_18] : memref<16x128xbf16, #tpu.memory_space<vmem>>, vector<16x128xbf16>
    tpu.vector_store %arg8[%c0_17, %c0_18], %23 {strides = array<i32>} : memref<16x128xbf16, #tpu.memory_space<vmem>>, vector<16x128xbf16>,
    return
  }
  func.func @transform_0(%arg0: i32) -> (i32, i32) {
    %c0_i32 = arith.constant 0 : i32
    %c0_i32_0 = arith.constant 0 : i32
    return %arg0, %c0_i32 : i32, i32
  }
  func.func @transform_1(%arg0: i32) -> (i32, i32) {
    %c0_i32 = arith.constant 0 : i32
    %c0_i32_0 = arith.constant 0 : i32
    %c0_i32_1 = arith.constant 0 : i32
    return %c0_i32, %c0_i32_0 : i32, i32
  }
  func.func @transform_2(%arg0: i32) -> (i32, i32) {
    %c0_i32 = arith.constant 0 : i32
    %c0_i32_0 = arith.constant 0 : i32
    %c0_i32_1 = arith.constant 0 : i32
    return %c0_i32, %c0_i32_0 : i32, i32
  }
  func.func @transform_3(%arg0: i32) -> (i32, i32) {
    %c0_i32 = arith.constant 0 : i32
    %c0_i32_0 = arith.constant 0 : i32
    %c0_i32_1 = arith.constant 0 : i32
    return %c0_i32, %c0_i32_0 : i32, i32
  }
  func.func @transform_4(%arg0: i32) -> (i32, i32) {
    %c0_i32 = arith.constant 0 : i32
    %c0_i32_0 = arith.constant 0 : i32
    %c0_i32_1 = arith.constant 0 : i32
    return %c0_i32, %c0_i32_0 : i32, i32
  }
  func.func @transform_5(%arg0: i32) -> (i32, i32) {
    %c0_i32 = arith.constant 0 : i32
    %c0_i32_0 = arith.constant 0 : i32
    %c0_i32_1 = arith.constant 0 : i32
    return %c0_i32, %c0_i32_0 : i32, i32
  }
  func.func @transform_6(%arg0: i32) -> (i32, i32) {
    %c0_i32 = arith.constant 0 : i32
    %c0_i32_0 = arith.constant 0 : i32
    %c0_i32_1 = arith.constant 0 : i32
    return %c0_i32, %c0_i32_0 : i32, i32
  }
  func.func @transform_7(%arg0: i32) -> (i32, i32) {
    %c0_i32 = arith.constant 0 : i32
    %c0_i32_0 = arith.constant 0 : i32
    return %arg0, %c0_i32 : i32, i32
  }
}

</mosaic_0001>

<llo_original>
// kernel: tpu_custom_call.1
$region0: #{tpu_custom_call.1}
  #allocation0 [shape = 'u32[]', space=smem, size = 0x4, offset = 0x4, fixed_abs, tag = 'smem constant byte address 0x4 - core index']
  #allocation1 [shape = 'u32[72,128]{1,0:T(1,128)}', space=vmem, size = 0x9000, scoped, tag = 'internal scratch']
  %s0 = inlined_call_operand.hbm [shape: f32[16,11], index: 0, kind: input, shape index: {}]
  %s1 = inlined_call_operand.hbm [shape: f32[11,512], index: 1, kind: input, shape index: {}]
  %s2 = inlined_call_operand.hbm [shape: f32[1,512], index: 2, kind: input, shape index: {}]
  %s3 = inlined_call_operand.hbm [shape: bf16[512,384], index: 3, kind: input, shape index: {}]
  %s4 = inlined_call_operand.vmem [shape: f32[1,384], index: 4, kind: input, shape index: {}]
  %s5 = inlined_call_operand.hbm [shape: bf16[384,128], index: 5, kind: input, shape index: {}]
  %s6 = inlined_call_operand.vmem [shape: f32[1,128], index: 6, kind: input, shape index: {}]
  %s7 = inlined_call_operand.hbm [shape: bf16[16,128], index: 7, kind: output, shape index: {}]
  %s8 = sld [smem:[#allocation0]]
  $region58: #{tpu_custom_call.1} parent=0
    _
  %s10 = ssub.s32 1, %s8
  %s11 = scalar_select 0, %s10, %s8
  $region1: #{tpu_custom_call.1} parent=0
    #allocation2 [shape = 'u8[8192]{0}', space=vmem, size = 0x2000, scoped, tag = 'input window, operand 0, single buffered']
    #allocation3 [shape = 's32[1]{0}', space=sflag, size = 0x4, scoped, tag = 'scoped memory for tpu_custom_call.1']
    #allocation4 [shape = 's32[1]{0}', space=sflag, size = 0x4, scoped, tag = 'scoped memory for tpu_custom_call.1']
    #allocation5 [shape = 'u8[32768]{0}', space=vmem, size = 0x8000, scoped, tag = 'input window, operand 1, single buffered']
    #allocation6 [shape = 's32[1]{0}', space=sflag, size = 0x4, scoped, tag = 'scoped memory for tpu_custom_call.1']
    #allocation7 [shape = 'u8[2048]{0}', space=vmem, size = 0x800, scoped, tag = 'input window, operand 2, single buffered']
    #allocation8 [shape = 'u8[393216]{0}', space=vmem, size = 0x60000, scoped, tag = 'input window, operand 3, single buffered']
    #allocation9 [shape = 's32[1]{0}', space=sflag, size = 0x4, scoped, tag = 'scoped memory for tpu_custom_call.1']
    #allocation10 [shape = 'u8[98304]{0}', space=vmem, size = 0x18000, scoped, tag = 'input window, operand 5, single buffered']
    #allocation11 [shape = 'u8[4096]{0}', space=vmem, size = 0x1000, scoped, tag = 'output window, operand 0, single buffered']
    %12 = vsyncpa [#allocation3], 0
    %13 = vsyncpa [#allocation6], 0
    %14 = vsyncpa [#allocation9], 0
    %15 = vsyncpa [#allocation4], 0
    // Predicated region
    $region2: #{tpu_custom_call.1} parent=1 // pred_check
      _
    $region3: #{tpu_custom_call.1} parent=1 // pred_check_branch
      %17 = sbr.rel (0) target = $region5
    $region4: #{tpu_custom_call.1} parent=1 // pred_region
      %19 = vsyncadd [#allocation3], 0
      %s20 = sshll.u32 %s0, 4
      %s21 = int_to_ptr.hbm [resolvable:$true] %s20
      %s22 = sshll.u32 [#allocation2], 4
      %s23 = int_to_ptr.vmem [resolvable:$true] %s22
      %28 = dma.hbm_to_vmem [thread:$0]  %s21, 256, %s23, [#allocation3], 128, 128, 8
    $region5: #{tpu_custom_call.1} parent=1 // pred_fallthru
      _
    // Predicated region
    $region6: #{tpu_custom_call.1} parent=1 // pred_check
      _
    $region7: #{tpu_custom_call.1} parent=1 // pred_check_branch
      %30 = sbr.rel (0) target = $region9
    $region8: #{tpu_custom_call.1} parent=1 // pred_region
      %32 = vsyncadd [#allocation6], 0
      %s33 = sshll.u32 %s1, 4
      %s34 = int_to_ptr.hbm [resolvable:$true] %s33
      %s35 = sshll.u32 [#allocation5], 4
      %s36 = int_to_ptr.vmem [resolvable:$true] %s35
      %41 = dma.hbm_to_vmem [thread:$0]  %s34, 1024, %s36, [#allocation6], 512, 512, 32
    $region9: #{tpu_custom_call.1} parent=1 // pred_fallthru
      _
    // Predicated region
    $region10: #{tpu_custom_call.1} parent=1 // pred_check
      _
    $region11: #{tpu_custom_call.1} parent=1 // pred_check_branch
      %43 = sbr.rel (0) target = $region13
    $region12: #{tpu_custom_call.1} parent=1 // pred_region
      %45 = vsyncadd [#allocation6], 0
      %s47 = sshll.u32 %s2, 4
      %s48 = int_to_ptr.hbm [resolvable:$true] %s47
      %s49 = sshll.u32 [#allocation7], 4
      %s50 = int_to_ptr.vmem [resolvable:$true] %s49
      %52 = dma.hbm_to_vmem [thread:$0]  %s48, 64, %s50, [#allocation6]
    $region13: #{tpu_custom_call.1} parent=1 // pred_fallthru
      _
    // Predicated region
    $region14: #{tpu_custom_call.1} parent=1 // pred_check
      _
    $region15: #{tpu_custom_call.1} parent=1 // pred_check_branch
      %54 = sbr.rel (0) target = $region17
    $region16: #{tpu_custom_call.1} parent=1 // pred_region
      %56 = vsyncadd [#allocation9], 0
      %s57 = sshll.u32 %s3, 4
      %s58 = int_to_ptr.hbm [resolvable:$true] %s57
      %s59 = sshll.u32 [#allocation8], 4
      %s60 = int_to_ptr.vmem [resolvable:$true] %s59
      %65 = dma.hbm_to_vmem [thread:$0]  %s58, 12288, %s60, [#allocation9], 192, 192, 12
    $region17: #{tpu_custom_call.1} parent=1 // pred_fallthru
      _
    // Predicated region
    $region18: #{tpu_custom_call.1} parent=1 // pred_check
      _
    $region19: #{tpu_custom_call.1} parent=1 // pred_check_branch
      %67 = sbr.rel (0) target = $region21
    $region20: #{tpu_custom_call.1} parent=1 // pred_region
      _
    $region21: #{tpu_custom_call.1} parent=1 // pred_fallthru
      _
    // Predicated region
    $region22: #{tpu_custom_call.1} parent=1 // pred_check
      _
    $region23: #{tpu_custom_call.1} parent=1 // pred_check_branch
      %69 = sbr.rel (0) target = $region25
    $region24: #{tpu_custom_call.1} parent=1 // pred_region
      %71 = vsyncadd [#allocation9], 0
      %s72 = sshll.u32 %s5, 4
      %s73 = int_to_ptr.hbm [resolvable:$true] %s72
      %s74 = sshll.u32 [#allocation10], 4
      %s75 = int_to_ptr.vmem [resolvable:$true] %s74
      %80 = dma.hbm_to_vmem [thread:$0]  %s73, 3072, %s75, [#allocation9], 64, 64, 4
    $region25: #{tpu_custom_call.1} parent=1 // pred_fallthru
      _
    // Predicated region
    $region26: #{tpu_custom_call.1} parent=1 // pred_check
      _
    $region27: #{tpu_custom_call.1} parent=1 // pred_check_branch
      %82 = sbr.rel (0) target = $region29
    $region28: #{tpu_custom_call.1} parent=1 // pred_region
      _
    $region29: #{tpu_custom_call.1} parent=1 // pred_fallthru
      _
    // Predicated region
    $region30: #{tpu_custom_call.1} parent=1 // pred_check
      _
    $region31: #{tpu_custom_call.1} parent=1 // pred_check_branch
      %84 = sbr.rel (0) target = $region33
    $region32: #{tpu_custom_call.1} parent=1 // pred_region
      %86 = dma.done [#allocation3], 256
    $region33: #{tpu_custom_call.1} parent=1 // pred_fallthru
      _
    // Predicated region
    $region34: #{tpu_custom_call.1} parent=1 // pred_check
      _
    $region35: #{tpu_custom_call.1} parent=1 // pred_check_branch
      %88 = sbr.rel (0) target = $region37
    $region36: #{tpu_custom_call.1} parent=1 // pred_region
      %90 = dma.done [#allocation6], 1024
    $region37: #{tpu_custom_call.1} parent=1 // pred_fallthru
      _
    // Predicated region
    $region38: #{tpu_custom_call.1} parent=1 // pred_check
      _
    $region39: #{tpu_custom_call.1} parent=1 // pred_check_branch
      %92 = sbr.rel (0) target = $region41
    $region40: #{tpu_custom_call.1} parent=1 // pred_region
      %94 = dma.done [#allocation6], 64
    $region41: #{tpu_custom_call.1} parent=1 // pred_fallthru
      _
    // Predicated region
    $region42: #{tpu_custom_call.1} parent=1 // pred_check
      _
    $region43: #{tpu_custom_call.1} parent=1 // pred_check_branch
      %96 = sbr.rel (0) target = $region45
    $region44: #{tpu_custom_call.1} parent=1 // pred_region
      %98 = dma.done [#allocation9], 12288
    $region45: #{tpu_custom_call.1} parent=1 // pred_fallthru
      _
    // Predicated region
    $region46: #{tpu_custom_call.1} parent=1 // pred_check
      _
    $region47: #{tpu_custom_call.1} parent=1 // pred_check_branch
      %100 = sbr.rel (0) target = $region49
    $region48: #{tpu_custom_call.1} parent=1 // pred_region
      %102 = dma.done [#allocation9], 3072
    $region49: #{tpu_custom_call.1} parent=1 // pred_fallthru
      _
    %v103 = vld [vmem:[#allocation2] sm:$0xff]
    %v104 = vld [vmem:[#allocation2 + $0x8] sm:$0xff]
    %v105 = vld [vmem:[#allocation5] sm:$0xff]
    %v106 = vld [vmem:[#allocation5 + $0x8] sm:$0xff]
    %v107 = vld [vmem:[#allocation5 + $0x10] sm:$0xff]
    %v108 = vld [vmem:[#allocation5 + $0x18] sm:$0xff]
    %v109 = vld [vmem:[#allocation5 + $0x20] sm:$0x7]
    %v110 = vld [vmem:[#allocation5 + $0x28] sm:$0x7]
    %v111 = vld [vmem:[#allocation5 + $0x30] sm:$0x7]
    %v112 = vld [vmem:[#allocation5 + $0x38] sm:$0x7]
    %v113 = vld [vmem:[#allocation7] sm:$0xf]
    %v115 = vperm.slane %v113, 0
    %v116 = vperm.slane %v113, 1
    %v117 = vperm.slane %v113, 2
    %v118 = vperm.slane %v113, 3
    %vm123 = vcmask 89088
    %v125 = vsel %vm123, %v103, 0
    %v128 = vsel %vm123, %v104, 0
    %vm130 = vcmask 1042432
    %v132 = vsel %vm130, %v109, 0
    %v135 = vsel %vm130, %v110, 0
    %v138 = vsel %vm130, %v111, 0
    %v141 = vsel %vm130, %v112, 0
    %143 = vmatpush.msra.mxu0 0.0
    %144 = vmatpush.msra.mxu0 0.0
    %145 = vmatpush.msra.mxu0 0.0
    %146 = vmatpush.msra.mxu0 0.0
    %147 = vmatpush.msra.mxu0 0.0
    %148 = vmatpush.msra.mxu0 0.0
    %149 = vmatpush.msra.mxu0 0.0
    %150 = vmatpush.msra.mxu0 0.0
    %151 = vmatpush.msra.mxu0 0.0
    %152 = vmatpush.msra.mxu0 0.0
    %153 = vmatpush.msra.mxu0 0.0
    %154 = vmatpush.msra.mxu0 0.0
    %155 = vmatpush.msra.mxu0 0.0
    %156 = vmatpush.msra.mxu0 0.0
    %157 = vmatpush.msra.mxu0 %v132
    %158 = vmatpush.msra.mxu0 %v105
    %159 = vmatmul.f32.gmra.mxu0 %v125
    %v160 = vpop.f32.mrf.mxu0
    %v161 = vadd.f32 %v115, %v160
    %162 = vmatmul.f32.gmra.mxu0 %v128
    %v163 = vpop.f32.mrf.mxu0
    %v164 = vadd.f32 %v115, %v163
    %165 = vdwg.mxu0
    %166 = vmatpush.msra.mxu0 0.0
    %167 = vmatpush.msra.mxu0 0.0
    %168 = vmatpush.msra.mxu0 0.0
    %169 = vmatpush.msra.mxu0 0.0
    %170 = vmatpush.msra.mxu0 0.0
    %171 = vmatpush.msra.mxu0 0.0
    %172 = vmatpush.msra.mxu0 0.0
    %173 = vmatpush.msra.mxu0 0.0
    %174 = vmatpush.msra.mxu0 0.0
    %175 = vmatpush.msra.mxu0 0.0
    %176 = vmatpush.msra.mxu0 0.0
    %177 = vmatpush.msra.mxu0 0.0
    %178 = vmatpush.msra.mxu0 0.0
    %179 = vmatpush.msra.mxu0 0.0
    %180 = vmatpush.msra.mxu0 %v135
    %181 = vmatpush.msra.mxu0 %v106
    %182 = vmatmul.f32.gmra.mxu0 %v125
    %v183 = vpop.f32.mrf.mxu0
    %v184 = vadd.f32 %v116, %v183
    %185 = vmatmul.f32.gmra.mxu0 %v128
    %v186 = vpop.f32.mrf.mxu0
    %v187 = vadd.f32 %v116, %v186
    %188 = vdwg.mxu0
    %189 = vmatpush.msra.mxu0 0.0
    %190 = vmatpush.msra.mxu0 0.0
    %191 = vmatpush.msra.mxu0 0.0
    %192 = vmatpush.msra.mxu0 0.0
    %193 = vmatpush.msra.mxu0 0.0
    %194 = vmatpush.msra.mxu0 0.0
    %195 = vmatpush.msra.mxu0 0.0
    %196 = vmatpush.msra.mxu0 0.0
    %197 = vmatpush.msra.mxu0 0.0
    %198 = vmatpush.msra.mxu0 0.0
    %199 = vmatpush.msra.mxu0 0.0
    %200 = vmatpush.msra.mxu0 0.0
    %201 = vmatpush.msra.mxu0 0.0
    %202 = vmatpush.msra.mxu0 0.0
    %203 = vmatpush.msra.mxu0 %v138
    %204 = vmatpush.msra.mxu0 %v107
    %205 = vmatmul.f32.gmra.mxu0 %v125
    %v206 = vpop.f32.mrf.mxu0
    %v207 = vadd.f32 %v117, %v206
    %208 = vmatmul.f32.gmra.mxu0 %v128
    %v209 = vpop.f32.mrf.mxu0
    %v210 = vadd.f32 %v117, %v209
    %211 = vdwg.mxu0
    %212 = vmatpush.msra.mxu0 0.0
    %213 = vmatpush.msra.mxu0 0.0
    %214 = vmatpush.msra.mxu0 0.0
    %215 = vmatpush.msra.mxu0 0.0
    %216 = vmatpush.msra.mxu0 0.0
    %217 = vmatpush.msra.mxu0 0.0
    %218 = vmatpush.msra.mxu0 0.0
    %219 = vmatpush.msra.mxu0 0.0
    %220 = vmatpush.msra.mxu0 0.0
    %221 = vmatpush.msra.mxu0 0.0
    %222 = vmatpush.msra.mxu0 0.0
    %223 = vmatpush.msra.mxu0 0.0
    %224 = vmatpush.msra.mxu0 0.0
    %225 = vmatpush.msra.mxu0 0.0
    %226 = vmatpush.msra.mxu0 %v141
    %227 = vmatpush.msra.mxu0 %v108
    %228 = vmatmul.f32.gmra.mxu0 %v125
    %v229 = vpop.f32.mrf.mxu0
    %v230 = vadd.f32 %v118, %v229
    %231 = vmatmul.f32.gmra.mxu0 %v128
    %v232 = vpop.f32.mrf.mxu0
    %v233 = vadd.f32 %v118, %v232
    %234 = vdwg.mxu0
    %v235 = vmax.f32 %v161, 0.0
    %v236 = vmax.f32 %v184, 0.0
    %v237 = vmax.f32 %v207, 0.0
    %v238 = vmax.f32 %v230, 0.0
    %v239 = vmax.f32 %v164, 0.0
    %v240 = vmax.f32 %v187, 0.0
    %v241 = vmax.f32 %v210, 0.0
    %v242 = vmax.f32 %v233, 0.0
    %v243 = vpack.c.bf16 %v239, %v235
    %v244 = vpack.c.bf16 %v240, %v236
    %v245 = vpack.c.bf16 %v241, %v237
    %v246 = vpack.c.bf16 %v242, %v238
    %v247 = vld [vmem:[#allocation8] sm:$0xff]
    %v248 = vld [vmem:[#allocation8 + $0x8] sm:$0xf]
    %v249 = vld [vmem:[#allocation8 + $0xc] sm:$0xff]
    %v250 = vld [vmem:[#allocation8 + $0x14] sm:$0xf]
    %v251 = vld [vmem:[#allocation8 + $0x18] sm:$0xff]
    %v252 = vld [vmem:[#allocation8 + $0x20] sm:$0xf]
    %v253 = vld [vmem:[#allocation8 + $0x24] sm:$0xff]
    %v254 = vld [vmem:[#allocation8 + $0x2c] sm:$0xf]
    %v255 = vld [vmem:[#allocation8 + $0x30] sm:$0xff]
    %v256 = vld [vmem:[#allocation8 + $0x38] sm:$0xf]
    %v257 = vld [vmem:[#allocation8 + $0x3c] sm:$0xff]
    %v258 = vld [vmem:[#allocation8 + $0x44] sm:$0xf]
    %v259 = vld [vmem:[#allocation8 + $0x48] sm:$0xff]
    %v260 = vld [vmem:[#allocation8 + $0x50] sm:$0xf]
    %v261 = vld [vmem:[#allocation8 + $0x54] sm:$0xff]
    %v262 = vld [vmem:[#allocation8 + $0x5c] sm:$0xf]
    %v263 = vld [vmem:[#allocation8 + $0x60] sm:$0xff]
    %v264 = vld [vmem:[#allocation8 + $0x68] sm:$0xf]
    %v265 = vld [vmem:[#allocation8 + $0x6c] sm:$0xff]
    %v266 = vld [vmem:[#allocation8 + $0x74] sm:$0xf]
    %v267 = vld [vmem:[#allocation8 + $0x78] sm:$0xff]
    %v268 = vld [vmem:[#allocation8 + $0x80] sm:$0xf]
    %v269 = vld [vmem:[#allocation8 + $0x84] sm:$0xff]
    %v270 = vld [vmem:[#allocation8 + $0x8c] sm:$0xf]
    %v271 = vld [vmem:[#allocation8 + $0x90] sm:$0xff]
    %v272 = vld [vmem:[#allocation8 + $0x98] sm:$0xf]
    %v273 = vld [vmem:[#allocation8 + $0x9c] sm:$0xff]
    %v274 = vld [vmem:[#allocation8 + $0xa4] sm:$0xf]
    %v275 = vld [vmem:[#allocation8 + $0xa8] sm:$0xff]
    %v276 = vld [vmem:[#allocation8 + $0xb0] sm:$0xf]
    %v277 = vld [vmem:[#allocation8 + $0xb4] sm:$0xff]
    %v278 = vld [vmem:[#allocation8 + $0xbc] sm:$0xf]
    %v279 = vld [vmem:[#allocation8 + $0xc0] sm:$0xff]
    %v280 = vld [vmem:[#allocation8 + $0xc8] sm:$0xf]
    %v281 = vld [vmem:[#allocation8 + $0xcc] sm:$0xff]
    %v282 = vld [vmem:[#allocation8 + $0xd4] sm:$0xf]
    %v283 = vld [vmem:[#allocation8 + $0xd8] sm:$0xff]
    %v284 = vld [vmem:[#allocation8 + $0xe0] sm:$0xf]
    %v285 = vld [vmem:[#allocation8 + $0xe4] sm:$0xff]
    %v286 = vld [vmem:[#allocation8 + $0xec] sm:$0xf]
    %v287 = vld [vmem:[#allocation8 + $0xf0] sm:$0xff]
    %v288 = vld [vmem:[#allocation8 + $0xf8] sm:$0xf]
    %v289 = vld [vmem:[#allocation8 + $0xfc] sm:$0xff]
    %v290 = vld [vmem:[#allocation8 + $0x104] sm:$0xf]
    %v291 = vld [vmem:[#allocation8 + $0x108] sm:$0xff]
    %v292 = vld [vmem:[#allocation8 + $0x110] sm:$0xf]
    %v293 = vld [vmem:[#allocation8 + $0x114] sm:$0xff]
    %v294 = vld [vmem:[#allocation8 + $0x11c] sm:$0xf]
    %v295 = vld [vmem:[#allocation8 + $0x120] sm:$0xff]
    %v296 = vld [vmem:[#allocation8 + $0x128] sm:$0xf]
    %v297 = vld [vmem:[#allocation8 + $0x12c] sm:$0xff]
    %v298 = vld [vmem:[#allocation8 + $0x134] sm:$0xf]
    %v299 = vld [vmem:[#allocation8 + $0x138] sm:$0xff]
    %v300 = vld [vmem:[#allocation8 + $0x140] sm:$0xf]
    %v301 = vld [vmem:[#allocation8 + $0x144] sm:$0xff]
    %v302 = vld [vmem:[#allocation8 + $0x14c] sm:$0xf]
    %v303 = vld [vmem:[#allocation8 + $0x150] sm:$0xff]
    %v304 = vld [vmem:[#allocation8 + $0x158] sm:$0xf]
    %v305 = vld [vmem:[#allocation8 + $0x15c] sm:$0xff]
    %v306 = vld [vmem:[#allocation8 + $0x164] sm:$0xf]
    %v307 = vld [vmem:[#allocation8 + $0x168] sm:$0xff]
    %v308 = vld [vmem:[#allocation8 + $0x170] sm:$0xf]
    %v309 = vld [vmem:[#allocation8 + $0x174] sm:$0xff]
    %v310 = vld [vmem:[#allocation8 + $0x17c] sm:$0xf]
    %v311 = vld [vmem:[#allocation8 + $0x180] sm:$0xff]
    %v312 = vld [vmem:[#allocation8 + $0x188] sm:$0xf]
    %v313 = vld [vmem:[#allocation8 + $0x18c] sm:$0xff]
    %v314 = vld [vmem:[#allocation8 + $0x194] sm:$0xf]
    %v315 = vld [vmem:[#allocation8 + $0x198] sm:$0xff]
    %v316 = vld [vmem:[#allocation8 + $0x1a0] sm:$0xf]
    %v317 = vld [vmem:[#allocation8 + $0x1a4] sm:$0xff]
    %v318 = vld [vmem:[#allocation8 + $0x1ac] sm:$0xf]
    %v319 = vld [vmem:[#allocation8 + $0x1b0] sm:$0xff]
    %v320 = vld [vmem:[#allocation8 + $0x1b8] sm:$0xf]
    %v321 = vld [vmem:[#allocation8 + $0x1bc] sm:$0xff]
    %v322 = vld [vmem:[#allocation8 + $0x1c4] sm:$0xf]
    %v323 = vld [vmem:[#allocation8 + $0x1c8] sm:$0xff]
    %v324 = vld [vmem:[#allocation8 + $0x1d0] sm:$0xf]
    %v325 = vld [vmem:[#allocation8 + $0x1d4] sm:$0xff]
    %v326 = vld [vmem:[#allocation8 + $0x1dc] sm:$0xf]
    %v327 = vld [vmem:[#allocation8 + $0x1e0] sm:$0xff]
    %v328 = vld [vmem:[#allocation8 + $0x1e8] sm:$0xf]
    %v329 = vld [vmem:[#allocation8 + $0x1ec] sm:$0xff]
    %v330 = vld [vmem:[#allocation8 + $0x1f4] sm:$0xf]
    %v331 = vld [vmem:[#allocation8 + $0x1f8] sm:$0xff]
    %v332 = vld [vmem:[#allocation8 + $0x200] sm:$0xf]
    %v333 = vld [vmem:[#allocation8 + $0x204] sm:$0xff]
    %v334 = vld [vmem:[#allocation8 + $0x20c] sm:$0xf]
    %v335 = vld [vmem:[#allocation8 + $0x210] sm:$0xff]
    %v336 = vld [vmem:[#allocation8 + $0x218] sm:$0xf]
    %v337 = vld [vmem:[#allocation8 + $0x21c] sm:$0xff]
    %v338 = vld [vmem:[#allocation8 + $0x224] sm:$0xf]
    %v339 = vld [vmem:[#allocation8 + $0x228] sm:$0xff]
    %v340 = vld [vmem:[#allocation8 + $0x230] sm:$0xf]
    %v341 = vld [vmem:[#allocation8 + $0x234] sm:$0xff]
    %v342 = vld [vmem:[#allocation8 + $0x23c] sm:$0xf]
    %v343 = vld [vmem:[#allocation8 + $0x240] sm:$0xff]
    %v344 = vld [vmem:[#allocation8 + $0x248] sm:$0xf]
    %v345 = vld [vmem:[#allocation8 + $0x24c] sm:$0xff]
    %v346 = vld [vmem:[#allocation8 + $0x254] sm:$0xf]
    %v347 = vld [vmem:[#allocation8 + $0x258] sm:$0xff]
    %v348 = vld [vmem:[#allocation8 + $0x260] sm:$0xf]
    %v349 = vld [vmem:[#allocation8 + $0x264] sm:$0xff]
    %v350 = vld [vmem:[#allocation8 + $0x26c] sm:$0xf]
    %v351 = vld [vmem:[#allocation8 + $0x270] sm:$0xff]
    %v352 = vld [vmem:[#allocation8 + $0x278] sm:$0xf]
    %v353 = vld [vmem:[#allocation8 + $0x27c] sm:$0xff]
    %v354 = vld [vmem:[#allocation8 + $0x284] sm:$0xf]
    %v355 = vld [vmem:[#allocation8 + $0x288] sm:$0xff]
    %v356 = vld [vmem:[#allocation8 + $0x290] sm:$0xf]
    %v357 = vld [vmem:[#allocation8 + $0x294] sm:$0xff]
    %v358 = vld [vmem:[#allocation8 + $0x29c] sm:$0xf]
    %v359 = vld [vmem:[#allocation8 + $0x2a0] sm:$0xff]
    %v360 = vld [vmem:[#allocation8 + $0x2a8] sm:$0xf]
    %v361 = vld [vmem:[#allocation8 + $0x2ac] sm:$0xff]
    %v362 = vld [vmem:[#allocation8 + $0x2b4] sm:$0xf]
    %v363 = vld [vmem:[#allocation8 + $0x2b8] sm:$0xff]
    %v364 = vld [vmem:[#allocation8 + $0x2c0] sm:$0xf]
    %v365 = vld [vmem:[#allocation8 + $0x2c4] sm:$0xff]
    %v366 = vld [vmem:[#allocation8 + $0x2cc] sm:$0xf]
    %v367 = vld [vmem:[#allocation8 + $0x2d0] sm:$0xff]
    %v368 = vld [vmem:[#allocation8 + $0x2d8] sm:$0xf]
    %v369 = vld [vmem:[#allocation8 + $0x2dc] sm:$0xff]
    %v370 = vld [vmem:[#allocation8 + $0x2e4] sm:$0xf]
    %v371 = vld [vmem:[#allocation8 + $0x2e8] sm:$0xff]
    %v372 = vld [vmem:[#allocation8 + $0x2f0] sm:$0xf]
    %v373 = vld [vmem:[#allocation8 + $0x2f4] sm:$0xff]
    %v374 = vld [vmem:[#allocation8 + $0x2fc] sm:$0xf]
    %v375 = vld [vmem:[%s4] sm:$0x7]
    %v377 = vperm.slane %v375, 0
    %v378 = vperm.slane %v375, 1
    %v379 = vperm.slane %v375, 2
    %v511 = vunpack.c.l.b16 %v247
    %v512 = vunpack.c.h.b16 %v247
    %v513 = vunpack.c.l.b16 %v248
    %v514 = vunpack.c.l.b16 %v249
    %v515 = vunpack.c.h.b16 %v249
    %v516 = vunpack.c.l.b16 %v250
    %v517 = vunpack.c.l.b16 %v251
    %v518 = vunpack.c.h.b16 %v251
    %v519 = vunpack.c.l.b16 %v252
    %v520 = vunpack.c.l.b16 %v253
    %v521 = vunpack.c.h.b16 %v253
    %v522 = vunpack.c.l.b16 %v254
    %v523 = vunpack.c.l.b16 %v255
    %v524 = vunpack.c.h.b16 %v255
    %v525 = vunpack.c.l.b16 %v256
    %v526 = vunpack.c.l.b16 %v257
    %v527 = vunpack.c.h.b16 %v257
    %v528 = vunpack.c.l.b16 %v258
    %v529 = vunpack.c.l.b16 %v259
    %v530 = vunpack.c.h.b16 %v259
    %v531 = vunpack.c.l.b16 %v260
    %v532 = vunpack.c.l.b16 %v261
    %v533 = vunpack.c.h.b16 %v261
    %v534 = vunpack.c.l.b16 %v262
    %v535 = vunpack.c.l.b16 %v263
    %v536 = vunpack.c.h.b16 %v263
    %v537 = vunpack.c.l.b16 %v264
    %v538 = vunpack.c.l.b16 %v265
    %v539 = vunpack.c.h.b16 %v265
    %v540 = vunpack.c.l.b16 %v266
    %v541 = vunpack.c.l.b16 %v267
    %v542 = vunpack.c.h.b16 %v267
    %v543 = vunpack.c.l.b16 %v268
    %v544 = vunpack.c.l.b16 %v269
    %v545 = vunpack.c.h.b16 %v269
    %v546 = vunpack.c.l.b16 %v270
    %v547 = vunpack.c.l.b16 %v271
    %v548 = vunpack.c.h.b16 %v271
    %v549 = vunpack.c.l.b16 %v272
    %v550 = vunpack.c.l.b16 %v273
    %v551 = vunpack.c.h.b16 %v273
    %v552 = vunpack.c.l.b16 %v274
    %v553 = vunpack.c.l.b16 %v275
    %v554 = vunpack.c.h.b16 %v275
    %v555 = vunpack.c.l.b16 %v276
    %v556 = vunpack.c.l.b16 %v277
    %v557 = vunpack.c.h.b16 %v277
    %v558 = vunpack.c.l.b16 %v278
    %v559 = vunpack.c.l.b16 %v279
    %v560 = vunpack.c.h.b16 %v279
    %v561 = vunpack.c.l.b16 %v280
    %v562 = vunpack.c.l.b16 %v281
    %v563 = vunpack.c.h.b16 %v281
    %v564 = vunpack.c.l.b16 %v282
    %v565 = vunpack.c.l.b16 %v283
    %v566 = vunpack.c.h.b16 %v283
    %v567 = vunpack.c.l.b16 %v284
    %v568 = vunpack.c.l.b16 %v285
    %v569 = vunpack.c.h.b16 %v285
    %v570 = vunpack.c.l.b16 %v286
    %v571 = vunpack.c.l.b16 %v287
    %v572 = vunpack.c.h.b16 %v287
    %v573 = vunpack.c.l.b16 %v288
    %v574 = vunpack.c.l.b16 %v289
    %v575 = vunpack.c.h.b16 %v289
    %v576 = vunpack.c.l.b16 %v290
    %v577 = vunpack.c.l.b16 %v291
    %v578 = vunpack.c.h.b16 %v291
    %v579 = vunpack.c.l.b16 %v292
    %v580 = vunpack.c.l.b16 %v293
    %v581 = vunpack.c.h.b16 %v293
    %v582 = vunpack.c.l.b16 %v294
    %v583 = vunpack.c.l.b16 %v295
    %v584 = vunpack.c.h.b16 %v295
    %v585 = vunpack.c.l.b16 %v296
    %v586 = vunpack.c.l.b16 %v297
    %v587 = vunpack.c.h.b16 %v297
    %v588 = vunpack.c.l.b16 %v298
    %v589 = vunpack.c.l.b16 %v299
    %v590 = vunpack.c.h.b16 %v299
    %v591 = vunpack.c.l.b16 %v300
    %v592 = vunpack.c.l.b16 %v301
    %v593 = vunpack.c.h.b16 %v301
    %v594 = vunpack.c.l.b16 %v302
    %v595 = vunpack.c.l.b16 %v303
    %v596 = vunpack.c.h.b16 %v303
    %v597 = vunpack.c.l.b16 %v304
    %v598 = vunpack.c.l.b16 %v305
    %v599 = vunpack.c.h.b16 %v305
    %v600 = vunpack.c.l.b16 %v306
    %v601 = vunpack.c.l.b16 %v307
    %v602 = vunpack.c.h.b16 %v307
    %v603 = vunpack.c.l.b16 %v308
    %v604 = vunpack.c.l.b16 %v309
    %v605 = vunpack.c.h.b16 %v309
    %v606 = vunpack.c.l.b16 %v310
    %v607 = vunpack.c.l.b16 %v311
    %v608 = vunpack.c.h.b16 %v311
    %v609 = vunpack.c.l.b16 %v312
    %v610 = vunpack.c.l.b16 %v313
    %v611 = vunpack.c.h.b16 %v313
    %v612 = vunpack.c.l.b16 %v314
    %v613 = vunpack.c.l.b16 %v315
    %v614 = vunpack.c.h.b16 %v315
    %v615 = vunpack.c.l.b16 %v316
    %v616 = vunpack.c.l.b16 %v317
    %v617 = vunpack.c.h.b16 %v317
    %v618 = vunpack.c.l.b16 %v318
    %v619 = vunpack.c.l.b16 %v319
    %v620 = vunpack.c.h.b16 %v319
    %v621 = vunpack.c.l.b16 %v320
    %v622 = vunpack.c.l.b16 %v321
    %v623 = vunpack.c.h.b16 %v321
    %v624 = vunpack.c.l.b16 %v322
    %v625 = vunpack.c.l.b16 %v323
    %v626 = vunpack.c.h.b16 %v323
    %v627 = vunpack.c.l.b16 %v324
    %v628 = vunpack.c.l.b16 %v325
    %v629 = vunpack.c.h.b16 %v325
    %v630 = vunpack.c.l.b16 %v326
    %v631 = vunpack.c.l.b16 %v327
    %v632 = vunpack.c.h.b16 %v327
    %v633 = vunpack.c.l.b16 %v328
    %v634 = vunpack.c.l.b16 %v329
    %v635 = vunpack.c.h.b16 %v329
    %v636 = vunpack.c.l.b16 %v330
    %v637 = vunpack.c.l.b16 %v331
    %v638 = vunpack.c.h.b16 %v331
    %v639 = vunpack.c.l.b16 %v332
    %v640 = vunpack.c.l.b16 %v333
    %v641 = vunpack.c.h.b16 %v333
    %v642 = vunpack.c.l.b16 %v334
    %v643 = vunpack.c.l.b16 %v335
    %v644 = vunpack.c.h.b16 %v335
    %v645 = vunpack.c.l.b16 %v336
    %v646 = vunpack.c.l.b16 %v337
    %v647 = vunpack.c.h.b16 %v337
    %v648 = vunpack.c.l.b16 %v338
    %v649 = vunpack.c.l.b16 %v339
    %v650 = vunpack.c.h.b16 %v339
    %v651 = vunpack.c.l.b16 %v340
    %v652 = vunpack.c.l.b16 %v341
    %v653 = vunpack.c.h.b16 %v341
    %v654 = vunpack.c.l.b16 %v342
    %v655 = vunpack.c.l.b16 %v343
    %v656 = vunpack.c.h.b16 %v343
    %v657 = vunpack.c.l.b16 %v344
    %v658 = vunpack.c.l.b16 %v345
    %v659 = vunpack.c.h.b16 %v345
    %v660 = vunpack.c.l.b16 %v346
    %v661 = vunpack.c.l.b16 %v347
    %v662 = vunpack.c.h.b16 %v347
    %v663 = vunpack.c.l.b16 %v348
    %v664 = vunpack.c.l.b16 %v349
    %v665 = vunpack.c.h.b16 %v349
    %v666 = vunpack.c.l.b16 %v350
    %v667 = vunpack.c.l.b16 %v351
    %v668 = vunpack.c.h.b16 %v351
    %v669 = vunpack.c.l.b16 %v352
    %v670 = vunpack.c.l.b16 %v353
    %v671 = vunpack.c.h.b16 %v353
    %v672 = vunpack.c.l.b16 %v354
    %v673 = vunpack.c.l.b16 %v355
    %v674 = vunpack.c.h.b16 %v355
    %v675 = vunpack.c.l.b16 %v356
    %v676 = vunpack.c.l.b16 %v357
    %v677 = vunpack.c.h.b16 %v357
    %v678 = vunpack.c.l.b16 %v358
    %v679 = vunpack.c.l.b16 %v359
    %v680 = vunpack.c.h.b16 %v359
    %v681 = vunpack.c.l.b16 %v360
    %v682 = vunpack.c.l.b16 %v361
    %v683 = vunpack.c.h.b16 %v361
    %v684 = vunpack.c.l.b16 %v362
    %v685 = vunpack.c.l.b16 %v363
    %v686 = vunpack.c.h.b16 %v363
    %v687 = vunpack.c.l.b16 %v364
    %v688 = vunpack.c.l.b16 %v365
    %v689 = vunpack.c.h.b16 %v365
    %v690 = vunpack.c.l.b16 %v366
    %v691 = vunpack.c.l.b16 %v367
    %v692 = vunpack.c.h.b16 %v367
    %v693 = vunpack.c.l.b16 %v368
    %v694 = vunpack.c.l.b16 %v369
    %v695 = vunpack.c.h.b16 %v369
    %v696 = vunpack.c.l.b16 %v370
    %v697 = vunpack.c.l.b16 %v371
    %v698 = vunpack.c.h.b16 %v371
    %v699 = vunpack.c.l.b16 %v372
    %v700 = vunpack.c.l.b16 %v373
    %v701 = vunpack.c.h.b16 %v373
    %v702 = vunpack.c.l.b16 %v374
    %v703 = vpack.c.b16 %v514, %v511
    %v704 = vpack.c.b16 %v515, %v512
    %v705 = vpack.c.b16 %v516, %v513
    %v706 = vpack.c.b16 %v520, %v517
    %v707 = vpack.c.b16 %v521, %v518
    %v708 = vpack.c.b16 %v522, %v519
    %v709 = vpack.c.b16 %v526, %v523
    %v710 = vpack.c.b16 %v527, %v524
    %v711 = vpack.c.b16 %v528, %v525
    %v712 = vpack.c.b16 %v532, %v529
    %v713 = vpack.c.b16 %v533, %v530
    %v714 = vpack.c.b16 %v534, %v531
    %v715 = vpack.c.b16 %v538, %v535
    %v716 = vpack.c.b16 %v539, %v536
    %v717 = vpack.c.b16 %v540, %v537
    %v718 = vpack.c.b16 %v544, %v541
    %v719 = vpack.c.b16 %v545, %v542
    %v720 = vpack.c.b16 %v546, %v543
    %v721 = vpack.c.b16 %v550, %v547
    %v722 = vpack.c.b16 %v551, %v548
    %v723 = vpack.c.b16 %v552, %v549
    %v724 = vpack.c.b16 %v556, %v553
    %v725 = vpack.c.b16 %v557, %v554
    %v726 = vpack.c.b16 %v558, %v555
    %v727 = vpack.c.b16 %v562, %v559
    %v728 = vpack.c.b16 %v563, %v560
    %v729 = vpack.c.b16 %v564, %v561
    %v730 = vpack.c.b16 %v568, %v565
    %v731 = vpack.c.b16 %v569, %v566
    %v732 = vpack.c.b16 %v570, %v567
    %v733 = vpack.c.b16 %v574, %v571
    %v734 = vpack.c.b16 %v575, %v572
    %v735 = vpack.c.b16 %v576, %v573
    %v736 = vpack.c.b16 %v580, %v577
    %v737 = vpack.c.b16 %v581, %v578
    %v738 = vpack.c.b16 %v582, %v579
    %v739 = vpack.c.b16 %v586, %v583
    %v740 = vpack.c.b16 %v587, %v584
    %v741 = vpack.c.b16 %v588, %v585
    %v742 = vpack.c.b16 %v592, %v589
    %v743 = vpack.c.b16 %v593, %v590
    %v744 = vpack.c.b16 %v594, %v591
    %v745 = vpack.c.b16 %v598, %v595
    %v746 = vpack.c.b16 %v599, %v596
    %v747 = vpack.c.b16 %v600, %v597
    %v748 = vpack.c.b16 %v604, %v601
    %v749 = vpack.c.b16 %v605, %v602
    %v750 = vpack.c.b16 %v606, %v603
    %v751 = vpack.c.b16 %v610, %v607
    %v752 = vpack.c.b16 %v611, %v608
    %v753 = vpack.c.b16 %v612, %v609
    %v754 = vpack.c.b16 %v616, %v613
    %v755 = vpack.c.b16 %v617, %v614
    %v756 = vpack.c.b16 %v618, %v615
    %v757 = vpack.c.b16 %v622, %v619
    %v758 = vpack.c.b16 %v623, %v620
    %v759 = vpack.c.b16 %v624, %v621
    %v760 = vpack.c.b16 %v628, %v625
    %v761 = vpack.c.b16 %v629, %v626
    %v762 = vpack.c.b16 %v630, %v627
    %v763 = vpack.c.b16 %v634, %v631
    %v764 = vpack.c.b16 %v635, %v632
    %v765 = vpack.c.b16 %v636, %v633
    %v766 = vpack.c.b16 %v640, %v637
    %v767 = vpack.c.b16 %v641, %v638
    %v768 = vpack.c.b16 %v642, %v639
    %v769 = vpack.c.b16 %v646, %v643
    %v770 = vpack.c.b16 %v647, %v644
    %v771 = vpack.c.b16 %v648, %v645
    %v772 = vpack.c.b16 %v652, %v649
    %v773 = vpack.c.b16 %v653, %v650
    %v774 = vpack.c.b16 %v654, %v651
    %v775 = vpack.c.b16 %v658, %v655
    %v776 = vpack.c.b16 %v659, %v656
    %v777 = vpack.c.b16 %v660, %v657
    %v778 = vpack.c.b16 %v664, %v661
    %v779 = vpack.c.b16 %v665, %v662
    %v780 = vpack.c.b16 %v666, %v663
    %v781 = vpack.c.b16 %v670, %v667
    %v782 = vpack.c.b16 %v671, %v668
    %v783 = vpack.c.b16 %v672, %v669
    %v784 = vpack.c.b16 %v676, %v673
    %v785 = vpack.c.b16 %v677, %v674
    %v786 = vpack.c.b16 %v678, %v675
    %v787 = vpack.c.b16 %v682, %v679
    %v788 = vpack.c.b16 %v683, %v680
    %v789 = vpack.c.b16 %v684, %v681
    %v790 = vpack.c.b16 %v688, %v685
    %v791 = vpack.c.b16 %v689, %v686
    %v792 = vpack.c.b16 %v690, %v687
    %v793 = vpack.c.b16 %v694, %v691
    %v794 = vpack.c.b16 %v695, %v692
    %v795 = vpack.c.b16 %v696, %v693
    %v796 = vpack.c.b16 %v700, %v697
    %v797 = vpack.c.b16 %v701, %v698
    %v798 = vpack.c.b16 %v702, %v699
    %895 = vmatpush.bf16.msra.mxu0 %v724
    %896 = vmatpush.bf16.msra.mxu0 %v721
    %897 = vmatpush.bf16.msra.mxu0 %v718
    %898 = vmatpush.bf16.msra.mxu0 %v715
    %899 = vmatpush.bf16.msra.mxu0 %v712
    %900 = vmatpush.bf16.msra.mxu0 %v709
    %901 = vmatpush.bf16.msra.mxu0 %v706
    %902 = vmatpush.bf16.msra.mxu0 %v703
    %903 = vmatmul.bf16.gmra.mxu0 %v243
    %v904 = vpop.f32.mrf.mxu0
    %v905 = vadd.f32 %v377, %v904
    %v906 = vpop.f32.mrf.mxu0
    %v907 = vadd.f32 %v377, %v906
    %908 = vdwg.mxu0
    %909 = vmatpush.bf16.msra.mxu0 %v748
    %910 = vmatpush.bf16.msra.mxu0 %v745
    %911 = vmatpush.bf16.msra.mxu0 %v742
    %912 = vmatpush.bf16.msra.mxu0 %v739
    %913 = vmatpush.bf16.msra.mxu0 %v736
    %914 = vmatpush.bf16.msra.mxu0 %v733
    %915 = vmatpush.bf16.msra.mxu0 %v730
    %916 = vmatpush.bf16.msra.mxu0 %v727
    %917 = vmatmul.bf16.gmra.mxu0 %v244
    %v918 = vpop.f32.mrf.mxu0
    %v919 = vadd.f32 %v905, %v918
    %v920 = vpop.f32.mrf.mxu0
    %v921 = vadd.f32 %v907, %v920
    %922 = vdwg.mxu0
    %923 = vmatpush.bf16.msra.mxu0 %v772
    %924 = vmatpush.bf16.msra.mxu0 %v769
    %925 = vmatpush.bf16.msra.mxu0 %v766
    %926 = vmatpush.bf16.msra.mxu0 %v763
    %927 = vmatpush.bf16.msra.mxu0 %v760
    %928 = vmatpush.bf16.msra.mxu0 %v757
    %929 = vmatpush.bf16.msra.mxu0 %v754
    %930 = vmatpush.bf16.msra.mxu0 %v751
    %931 = vmatmul.bf16.gmra.mxu0 %v245
    %v932 = vpop.f32.mrf.mxu0
    %v933 = vadd.f32 %v919, %v932
    %v934 = vpop.f32.mrf.mxu0
    %v935 = vadd.f32 %v921, %v934
    %936 = vdwg.mxu0
    %937 = vmatpush.bf16.msra.mxu0 %v796
    %938 = vmatpush.bf16.msra.mxu0 %v793
    %939 = vmatpush.bf16.msra.mxu0 %v790
    %940 = vmatpush.bf16.msra.mxu0 %v787
    %941 = vmatpush.bf16.msra.mxu0 %v784
    %942 = vmatpush.bf16.msra.mxu0 %v781
    %943 = vmatpush.bf16.msra.mxu0 %v778
    %944 = vmatpush.bf16.msra.mxu0 %v775
    %945 = vmatmul.bf16.gmra.mxu0 %v246
    %v946 = vpop.f32.mrf.mxu0
    %v947 = vadd.f32 %v933, %v946
    %v948 = vpop.f32.mrf.mxu0
    %v949 = vadd.f32 %v935, %v948
    %950 = vdwg.mxu0
    %951 = vmatpush.bf16.msra.mxu0 %v725
    %952 = vmatpush.bf16.msra.mxu0 %v722
    %953 = vmatpush.bf16.msra.mxu0 %v719
    %954 = vmatpush.bf16.msra.mxu0 %v716
    %955 = vmatpush.bf16.msra.mxu0 %v713
    %956 = vmatpush.bf16.msra.mxu0 %v710
    %957 = vmatpush.bf16.msra.mxu0 %v707
    %958 = vmatpush.bf16.msra.mxu0 %v704
    %959 = vmatmul.bf16.gmra.mxu0 %v243
    %v960 = vpop.f32.mrf.mxu0
    %v961 = vadd.f32 %v378, %v960
    %v962 = vpop.f32.mrf.mxu0
    %v963 = vadd.f32 %v378, %v962
    %964 = vdwg.mxu0
    %965 = vmatpush.bf16.msra.mxu0 %v749
    %966 = vmatpush.bf16.msra.mxu0 %v746
    %967 = vmatpush.bf16.msra.mxu0 %v743
    %968 = vmatpush.bf16.msra.mxu0 %v740
    %969 = vmatpush.bf16.msra.mxu0 %v737
    %970 = vmatpush.bf16.msra.mxu0 %v734
    %971 = vmatpush.bf16.msra.mxu0 %v731
    %972 = vmatpush.bf16.msra.mxu0 %v728
    %973 = vmatmul.bf16.gmra.mxu0 %v244
    %v974 = vpop.f32.mrf.mxu0
    %v975 = vadd.f32 %v961, %v974
    %v976 = vpop.f32.mrf.mxu0
    %v977 = vadd.f32 %v963, %v976
    %978 = vdwg.mxu0
    %979 = vmatpush.bf16.msra.mxu0 %v773
    %980 = vmatpush.bf16.msra.mxu0 %v770
    %981 = vmatpush.bf16.msra.mxu0 %v767
    %982 = vmatpush.bf16.msra.mxu0 %v764
    %983 = vmatpush.bf16.msra.mxu0 %v761
    %984 = vmatpush.bf16.msra.mxu0 %v758
    %985 = vmatpush.bf16.msra.mxu0 %v755
    %986 = vmatpush.bf16.msra.mxu0 %v752
    %987 = vmatmul.bf16.gmra.mxu0 %v245
    %v988 = vpop.f32.mrf.mxu0
    %v989 = vadd.f32 %v975, %v988
    %v990 = vpop.f32.mrf.mxu0
    %v991 = vadd.f32 %v977, %v990
    %992 = vdwg.mxu0
    %993 = vmatpush.bf16.msra.mxu0 %v797
    %994 = vmatpush.bf16.msra.mxu0 %v794
    %995 = vmatpush.bf16.msra.mxu0 %v791
    %996 = vmatpush.bf16.msra.mxu0 %v788
    %997 = vmatpush.bf16.msra.mxu0 %v785
    %998 = vmatpush.bf16.msra.mxu0 %v782
    %999 = vmatpush.bf16.msra.mxu0 %v779
    %1000 = vmatpush.bf16.msra.mxu0 %v776
    %1001 = vmatmul.bf16.gmra.mxu0 %v246
    %v1002 = vpop.f32.mrf.mxu0
    %v1003 = vadd.f32 %v989, %v1002
    %v1004 = vpop.f32.mrf.mxu0
    %v1005 = vadd.f32 %v991, %v1004
    %1006 = vdwg.mxu0
    %1007 = vmatpush.bf16.msra.mxu0 %v726
    %1008 = vmatpush.bf16.msra.mxu0 %v723
    %1009 = vmatpush.bf16.msra.mxu0 %v720
    %1010 = vmatpush.bf16.msra.mxu0 %v717
    %1011 = vmatpush.bf16.msra.mxu0 %v714
    %1012 = vmatpush.bf16.msra.mxu0 %v711
    %1013 = vmatpush.bf16.msra.mxu0 %v708
    %1014 = vmatpush.bf16.msra.mxu0 %v705
    %1015 = vmatmul.bf16.gmra.mxu0 %v243
    %v1016 = vpop.f32.mrf.mxu0
    %v1017 = vadd.f32 %v379, %v1016
    %v1018 = vpop.f32.mrf.mxu0
    %v1019 = vadd.f32 %v379, %v1018
    %1020 = vdwg.mxu0
    %1021 = vmatpush.bf16.msra.mxu0 %v750
    %1022 = vmatpush.bf16.msra.mxu0 %v747
    %1023 = vmatpush.bf16.msra.mxu0 %v744
    %1024 = vmatpush.bf16.msra.mxu0 %v741
    %1025 = vmatpush.bf16.msra.mxu0 %v738
    %1026 = vmatpush.bf16.msra.mxu0 %v735
    %1027 = vmatpush.bf16.msra.mxu0 %v732
    %1028 = vmatpush.bf16.msra.mxu0 %v729
    %1029 = vmatmul.bf16.gmra.mxu0 %v244
    %v1030 = vpop.f32.mrf.mxu0
    %v1031 = vadd.f32 %v1017, %v1030
    %v1032 = vpop.f32.mrf.mxu0
    %v1033 = vadd.f32 %v1019, %v1032
    %1034 = vdwg.mxu0
    %1035 = vmatpush.bf16.msra.mxu0 %v774
    %1036 = vmatpush.bf16.msra.mxu0 %v771
    %1037 = vmatpush.bf16.msra.mxu0 %v768
    %1038 = vmatpush.bf16.msra.mxu0 %v765
    %1039 = vmatpush.bf16.msra.mxu0 %v762
    %1040 = vmatpush.bf16.msra.mxu0 %v759
    %1041 = vmatpush.bf16.msra.mxu0 %v756
    %1042 = vmatpush.bf16.msra.mxu0 %v753
    %1043 = vmatmul.bf16.gmra.mxu0 %v245
    %v1044 = vpop.f32.mrf.mxu0
    %v1045 = vadd.f32 %v1031, %v1044
    %v1046 = vpop.f32.mrf.mxu0
    %v1047 = vadd.f32 %v1033, %v1046
    %1048 = vdwg.mxu0
    %1049 = vmatpush.bf16.msra.mxu0 %v798
    %1050 = vmatpush.bf16.msra.mxu0 %v795
    %1051 = vmatpush.bf16.msra.mxu0 %v792
    %1052 = vmatpush.bf16.msra.mxu0 %v789
    %1053 = vmatpush.bf16.msra.mxu0 %v786
    %1054 = vmatpush.bf16.msra.mxu0 %v783
    %1055 = vmatpush.bf16.msra.mxu0 %v780
    %1056 = vmatpush.bf16.msra.mxu0 %v777
    %1057 = vmatmul.bf16.gmra.mxu0 %v246
    %v1058 = vpop.f32.mrf.mxu0
    %v1059 = vadd.f32 %v1045, %v1058
    %v1060 = vpop.f32.mrf.mxu0
    %v1061 = vadd.f32 %v1047, %v1060
    %1062 = vdwg.mxu0
    %v1063 = vmax.f32 %v947, 0.0
    %v1064 = vmax.f32 %v1003, 0.0
    %v1065 = vmax.f32 %v1059, 0.0
    %v1066 = vmax.f32 %v949, 0.0
    %v1067 = vmax.f32 %v1005, 0.0
    %v1068 = vmax.f32 %v1061, 0.0
    %v1069 = vpack.c.bf16 %v1066, %v1063
    %v1070 = vpack.c.bf16 %v1067, %v1064
    %v1071 = vpack.c.bf16 %v1068, %v1065
    %v1072 = vld [vmem:[#allocation10] sm:$0xf]
    %v1073 = vld [vmem:[#allocation10 + $0x4] sm:$0xf]
    %v1074 = vld [vmem:[#allocation10 + $0x8] sm:$0xf]
    %v1075 = vld [vmem:[#allocation10 + $0xc] sm:$0xf]
    %v1076 = vld [vmem:[#allocation10 + $0x10] sm:$0xf]
    %v1077 = vld [vmem:[#allocation10 + $0x14] sm:$0xf]
    %v1078 = vld [vmem:[#allocation10 + $0x18] sm:$0xf]
    %v1079 = vld [vmem:[#allocation10 + $0x1c] sm:$0xf]
    %v1080 = vld [vmem:[#allocation10 + $0x20] sm:$0xf]
    %v1081 = vld [vmem:[#allocation10 + $0x24] sm:$0xf]
    %v1082 = vld [vmem:[#allocation10 + $0x28] sm:$0xf]
    %v1083 = vld [vmem:[#allocation10 + $0x2c] sm:$0xf]
    %v1084 = vld [vmem:[#allocation10 + $0x30] sm:$0xf]
    %v1085 = vld [vmem:[#allocation10 + $0x34] sm:$0xf]
    %v1086 = vld [vmem:[#allocation10 + $0x38] sm:$0xf]
    %v1087 = vld [vmem:[#allocation10 + $0x3c] sm:$0xf]
    %v1088 = vld [vmem:[#allocation10 + $0x40] sm:$0xf]
    %v1089 = vld [vmem:[#allocation10 + $0x44] sm:$0xf]
    %v1090 = vld [vmem:[#allocation10 + $0x48] sm:$0xf]
    %v1091 = vld [vmem:[#allocation10 + $0x4c] sm:$0xf]
    %v1092 = vld [vmem:[#allocation10 + $0x50] sm:$0xf]
    %v1093 = vld [vmem:[#allocation10 + $0x54] sm:$0xf]
    %v1094 = vld [vmem:[#allocation10 + $0x58] sm:$0xf]
    %v1095 = vld [vmem:[#allocation10 + $0x5c] sm:$0xf]
    %v1096 = vld [vmem:[#allocation10 + $0x60] sm:$0xf]
    %v1097 = vld [vmem:[#allocation10 + $0x64] sm:$0xf]
    %v1098 = vld [vmem:[#allocation10 + $0x68] sm:$0xf]
    %v1099 = vld [vmem:[#allocation10 + $0x6c] sm:$0xf]
    %v1100 = vld [vmem:[#allocation10 + $0x70] sm:$0xf]
    %v1101 = vld [vmem:[#allocation10 + $0x74] sm:$0xf]
    %v1102 = vld [vmem:[#allocation10 + $0x78] sm:$0xf]
    %v1103 = vld [vmem:[#allocation10 + $0x7c] sm:$0xf]
    %v1104 = vld [vmem:[#allocation10 + $0x80] sm:$0xf]
    %v1105 = vld [vmem:[#allocation10 + $0x84] sm:$0xf]
    %v1106 = vld [vmem:[#allocation10 + $0x88] sm:$0xf]
    %v1107 = vld [vmem:[#allocation10 + $0x8c] sm:$0xf]
    %v1108 = vld [vmem:[#allocation10 + $0x90] sm:$0xf]
    %v1109 = vld [vmem:[#allocation10 + $0x94] sm:$0xf]
    %v1110 = vld [vmem:[#allocation10 + $0x98] sm:$0xf]
    %v1111 = vld [vmem:[#allocation10 + $0x9c] sm:$0xf]
    %v1112 = vld [vmem:[#allocation10 + $0xa0] sm:$0xf]
    %v1113 = vld [vmem:[#allocation10 + $0xa4] sm:$0xf]
    %v1114 = vld [vmem:[#allocation10 + $0xa8] sm:$0xf]
    %v1115 = vld [vmem:[#allocation10 + $0xac] sm:$0xf]
    %v1116 = vld [vmem:[#allocation10 + $0xb0] sm:$0xf]
    %v1117 = vld [vmem:[#allocation10 + $0xb4] sm:$0xf]
    %v1118 = vld [vmem:[#allocation10 + $0xb8] sm:$0xf]
    %v1119 = vld [vmem:[#allocation10 + $0xbc] sm:$0xf]
    %v1120 = vld [vmem:[%s6] sm:$0x1]
    %v1122 = vperm.slane %v1120, 0
    %v1172 = vunpack.c.l.b16 %v1072
    %v1173 = vunpack.c.l.b16 %v1073
    %v1174 = vunpack.c.l.b16 %v1074
    %v1175 = vunpack.c.l.b16 %v1075
    %v1176 = vunpack.c.l.b16 %v1076
    %v1177 = vunpack.c.l.b16 %v1077
    %v1178 = vunpack.c.l.b16 %v1078
    %v1179 = vunpack.c.l.b16 %v1079
    %v1180 = vunpack.c.l.b16 %v1080
    %v1181 = vunpack.c.l.b16 %v1081
    %v1182 = vunpack.c.l.b16 %v1082
    %v1183 = vunpack.c.l.b16 %v1083
    %v1184 = vunpack.c.l.b16 %v1084
    %v1185 = vunpack.c.l.b16 %v1085
    %v1186 = vunpack.c.l.b16 %v1086
    %v1187 = vunpack.c.l.b16 %v1087
    %v1188 = vunpack.c.l.b16 %v1088
    %v1189 = vunpack.c.l.b16 %v1089
    %v1190 = vunpack.c.l.b16 %v1090
    %v1191 = vunpack.c.l.b16 %v1091
    %v1192 = vunpack.c.l.b16 %v1092
    %v1193 = vunpack.c.l.b16 %v1093
    %v1194 = vunpack.c.l.b16 %v1094
    %v1195 = vunpack.c.l.b16 %v1095
    %v1196 = vunpack.c.l.b16 %v1096
    %v1197 = vunpack.c.l.b16 %v1097
    %v1198 = vunpack.c.l.b16 %v1098
    %v1199 = vunpack.c.l.b16 %v1099
    %v1200 = vunpack.c.l.b16 %v1100
    %v1201 = vunpack.c.l.b16 %v1101
    %v1202 = vunpack.c.l.b16 %v1102
    %v1203 = vunpack.c.l.b16 %v1103
    %v1204 = vunpack.c.l.b16 %v1104
    %v1205 = vunpack.c.l.b16 %v1105
    %v1206 = vunpack.c.l.b16 %v1106
    %v1207 = vunpack.c.l.b16 %v1107
    %v1208 = vunpack.c.l.b16 %v1108
    %v1209 = vunpack.c.l.b16 %v1109
    %v1210 = vunpack.c.l.b16 %v1110
    %v1211 = vunpack.c.l.b16 %v1111
    %v1212 = vunpack.c.l.b16 %v1112
    %v1213 = vunpack.c.l.b16 %v1113
    %v1214 = vunpack.c.l.b16 %v1114
    %v1215 = vunpack.c.l.b16 %v1115
    %v1216 = vunpack.c.l.b16 %v1116
    %v1217 = vunpack.c.l.b16 %v1117
    %v1218 = vunpack.c.l.b16 %v1118
    %v1219 = vunpack.c.l.b16 %v1119
    %v1220 = vpack.c.b16 %v1173, %v1172
    %v1221 = vpack.c.b16 %v1175, %v1174
    %v1222 = vpack.c.b16 %v1177, %v1176
    %v1223 = vpack.c.b16 %v1179, %v1178
    %v1224 = vpack.c.b16 %v1181, %v1180
    %v1225 = vpack.c.b16 %v1183, %v1182
    %v1226 = vpack.c.b16 %v1185, %v1184
    %v1227 = vpack.c.b16 %v1187, %v1186
    %v1228 = vpack.c.b16 %v1189, %v1188
    %v1229 = vpack.c.b16 %v1191, %v1190
    %v1230 = vpack.c.b16 %v1193, %v1192
    %v1231 = vpack.c.b16 %v1195, %v1194
    %v1232 = vpack.c.b16 %v1197, %v1196
    %v1233 = vpack.c.b16 %v1199, %v1198
    %v1234 = vpack.c.b16 %v1201, %v1200
    %v1235 = vpack.c.b16 %v1203, %v1202
    %v1236 = vpack.c.b16 %v1205, %v1204
    %v1237 = vpack.c.b16 %v1207, %v1206
    %v1238 = vpack.c.b16 %v1209, %v1208
    %v1239 = vpack.c.b16 %v1211, %v1210
    %v1240 = vpack.c.b16 %v1213, %v1212
    %v1241 = vpack.c.b16 %v1215, %v1214
    %v1242 = vpack.c.b16 %v1217, %v1216
    %v1243 = vpack.c.b16 %v1219, %v1218
    %1268 = vmatpush.bf16.msra.mxu0 %v1227
    %1269 = vmatpush.bf16.msra.mxu0 %v1226
    %1270 = vmatpush.bf16.msra.mxu0 %v1225
    %1271 = vmatpush.bf16.msra.mxu0 %v1224
    %1272 = vmatpush.bf16.msra.mxu0 %v1223
    %1273 = vmatpush.bf16.msra.mxu0 %v1222
    %1274 = vmatpush.bf16.msra.mxu0 %v1221
    %1275 = vmatpush.bf16.msra.mxu0 %v1220
    %1276 = vmatmul.bf16.gmra.mxu0 %v1069
    %v1277 = vpop.f32.mrf.mxu0
    %v1278 = vadd.f32 %v1122, %v1277
    %v1279 = vpop.f32.mrf.mxu0
    %v1280 = vadd.f32 %v1122, %v1279
    %1281 = vdwg.mxu0
    %1282 = vmatpush.bf16.msra.mxu0 %v1235
    %1283 = vmatpush.bf16.msra.mxu0 %v1234
    %1284 = vmatpush.bf16.msra.mxu0 %v1233
    %1285 = vmatpush.bf16.msra.mxu0 %v1232
    %1286 = vmatpush.bf16.msra.mxu0 %v1231
    %1287 = vmatpush.bf16.msra.mxu0 %v1230
    %1288 = vmatpush.bf16.msra.mxu0 %v1229
    %1289 = vmatpush.bf16.msra.mxu0 %v1228
    %1290 = vmatmul.bf16.gmra.mxu0 %v1070
    %v1291 = vpop.f32.mrf.mxu0
    %v1292 = vadd.f32 %v1278, %v1291
    %v1293 = vpop.f32.mrf.mxu0
    %v1294 = vadd.f32 %v1280, %v1293
    %1295 = vdwg.mxu0
    %1296 = vmatpush.bf16.msra.mxu0 %v1243
    %1297 = vmatpush.bf16.msra.mxu0 %v1242
    %1298 = vmatpush.bf16.msra.mxu0 %v1241
    %1299 = vmatpush.bf16.msra.mxu0 %v1240
    %1300 = vmatpush.bf16.msra.mxu0 %v1239
    %1301 = vmatpush.bf16.msra.mxu0 %v1238
    %1302 = vmatpush.bf16.msra.mxu0 %v1237
    %1303 = vmatpush.bf16.msra.mxu0 %v1236
    %1304 = vmatmul.bf16.gmra.mxu0 %v1071
    %v1305 = vpop.f32.mrf.mxu0
    %v1306 = vadd.f32 %v1292, %v1305
    %v1307 = vpop.f32.mrf.mxu0
    %v1308 = vadd.f32 %v1294, %v1307
    %1309 = vdwg.mxu0
    %v1310 = vtanh.pop %v1306
    %v1311 = vtanh.pop %v1308
    %v1312 = vpack.c.bf16 %v1310, %v1310
    %v1313 = vpack.c.bf16 %v1311, %v1311
    %1314 = vst [vmem:[#allocation11] sm:$0xf] %v1312
    %1315 = vst [vmem:[#allocation11 + $0x4] sm:$0xf] %v1313
    // Predicated region
    $region50: #{tpu_custom_call.1} parent=1 // pred_check
      _
    $region51: #{tpu_custom_call.1} parent=1 // pred_check_branch
      %1317 = sbr.rel (0) target = $region53
    $region52: #{tpu_custom_call.1} parent=1 // pred_region
      %1319 = vsyncadd [#allocation4], 0
      %s1320 = sshll.u32 [#allocation11], 4
      %s1321 = int_to_ptr.vmem [resolvable:$true] %s1320
      %s1322 = sshll.u32 %s7, 4
      %s1323 = int_to_ptr.hbm [resolvable:$true] %s1322
      %1328 = dma.vmem_to_hbm [thread:$0]  %s1321, 128, %s1323, [#allocation4], 64, 64, 4
    $region53: #{tpu_custom_call.1} parent=1 // pred_fallthru
      _
    // Predicated region
    $region54: #{tpu_custom_call.1} parent=1 // pred_check
      _
    $region55: #{tpu_custom_call.1} parent=1 // pred_check_branch
      %1330 = sbr.rel (0) target = $region57
    $region56: #{tpu_custom_call.1} parent=1 // pred_region
      %1332 = dma.done [#allocation4], 128
    $region57: #{tpu_custom_call.1} parent=1 // pred_fallthru
      _
    %1333 = vsyncpa [#allocation3], 1
    %1334 = vsyncpa [#allocation6], 1
    %1335 = vsyncpa [#allocation9], 1
    %1336 = vsyncpa [#allocation4], 1

</llo_original>
